<compile_context>
chip_gen: v6e
topology: v6e:2x2x1
jax: 0.10.0
libtpu: 0.0.40
codegen_flags: <defaults>
</compile_context>

<pallas_src>
import math

import jax
import jax.numpy as jnp
from jax.experimental import pallas as pl
from jax.experimental.pallas import tpu as pltpu


def _add_kernel(a_ref, b_ref, o_ref):
    o_ref[...] = a_ref[...] + b_ref[...]


def _single_block_add(a2, b2):
    rows, cols = a2.shape
    return pl.pallas_call(
        _add_kernel,
        out_shape=jax.ShapeDtypeStruct((rows, cols), a2.dtype),
        in_specs=[
            pl.BlockSpec(memory_space=pltpu.MemorySpace.VMEM),
            pl.BlockSpec(memory_space=pltpu.MemorySpace.VMEM),
        ],
        out_specs=pl.BlockSpec(memory_space=pltpu.MemorySpace.VMEM),
    )(a2, b2)


def pallas_add(x320, x305):
    assert x320.shape == x305.shape and x320.dtype == x305.dtype
    orig_shape = x320.shape
    n = math.prod(orig_shape)

    lane = 128
    # Pick the widest lane-dense slab (last dim a multiple of 128) that divides
    # n exactly — wider last dim => longer unmasked vst runs, fewer masked
    # sublane-remainder rows. For [1,224,14,14]: n=43904 -> cols=896, rows=49.
    cols = 0
    for c in (8192, 4096, 2048, 1024, 896, 768, 640, 512, 384, 256, 128):
        if n % c == 0:
            cols = c
            break

    if cols:
        # Fast path: pure reshapes, no extra HBM passes.
        a2 = jnp.ravel(x320).reshape(n // cols, cols)
        b2 = jnp.ravel(x305).reshape(n // cols, cols)
        out2 = _single_block_add(a2, b2)
        return out2.reshape(orig_shape)

    # Fallback (not hit for this module's shape): pad flat length to a
    # multiple of 128, add, then slice back.
    n_pad = ((n + lane - 1) // lane) * lane
    a = jnp.pad(jnp.ravel(x320), (0, n_pad - n))
    b = jnp.pad(jnp.ravel(x305), (0, n_pad - n))
    out2 = _single_block_add(a.reshape(n_pad // lane, lane),
                             b.reshape(n_pad // lane, lane))
    return out2.reshape(-1)[:n].reshape(orig_shape)


if __name__ == "__main__":
    key = jax.random.PRNGKey(0)
    k1, k2 = jax.random.split(key)
    # Shapes consistent with the module: NCHW [1, 224, 14, 14]
    x305 = jax.random.normal(k1, (1, 224, 14, 14), dtype=jnp.float32)
    x320 = jax.random.normal(k2, (1, 224, 14, 14), dtype=jnp.float32)

    out = pallas_add(x320, x305)
    jax.block_until_ready(out)

    ref = x320 + x305
    assert out.shape == ref.shape
    assert jnp.allclose(out, ref, atol=1e-6, rtol=1e-6)
    print("KERNEL_OK")
</pallas_src>

<mosaic_0001>
module attributes {stable_mosaic.version = 11 : i64} {
  func.func @_add_kernel(%arg0: memref<49x896xf32, #tpu.memory_space<vmem>>, %arg1: memref<49x896xf32, #tpu.memory_space<vmem>>, %arg2: memref<49x896xf32, #tpu.memory_space<vmem>>) attributes {dimension_semantics = [], scalar_prefetch = 0 : i64, scratch_operands = 0 : i64, tpu.core_type = #tpu.core_type<tc>} {
    %c0 = arith.constant 0 : index
    %c0_0 = arith.constant 0 : index
    %0 = vector.load %arg0[%c0, %c0_0] : memref<49x896xf32, #tpu.memory_space<vmem>>, vector<49x896xf32>
    %c0_1 = arith.constant 0 : index
    %c0_2 = arith.constant 0 : index
    %1 = vector.load %arg1[%c0_1, %c0_2] : memref<49x896xf32, #tpu.memory_space<vmem>>, vector<49x896xf32>
    %2 = arith.addf %0, %1 : vector<49x896xf32>
    %c0_3 = arith.constant 0 : index
    %c0_4 = arith.constant 0 : index
    %3 = vector.load %arg2[%c0_3, %c0_4] : memref<49x896xf32, #tpu.memory_space<vmem>>, vector<49x896xf32>
    tpu.vector_store %arg2[%c0_3, %c0_4], %2 {strides = array<i32>} : memref<49x896xf32, #tpu.memory_space<vmem>>, vector<49x896xf32>,
    return
  }
}

</mosaic_0001>

<llo_original>
// kernel: tpu_custom_call.1
$region0: #{tpu_custom_call.1}
  #allocation0 [shape = 'u32[]', space=smem, size = 0x4, offset = 0x4, fixed_abs, tag = 'smem constant byte address 0x4 - core index']
  #allocation1 [shape = 'u32[144,128]{1,0:T(1,128)}', space=vmem, size = 0x12000, scoped, tag = 'internal scratch']
  %s0 = inlined_call_operand.hbm [shape: f32[49,896], index: 0, kind: input, shape index: {}]
  %s1 = inlined_call_operand.hbm [shape: f32[49,896], index: 1, kind: input, shape index: {}]
  %s2 = inlined_call_operand.hbm [shape: f32[49,896], index: 2, kind: output, shape index: {}]
  %s3 = sld [smem:[#allocation0]]
  $region26: #{tpu_custom_call.1} parent=0
    _
  %s5 = ssub.s32 1, %s3
  %s6 = scalar_select 0, %s5, %s3
  $region1: #{tpu_custom_call.1} parent=0
    #allocation2 [shape = 'u8[200704]{0}', space=vmem, size = 0x31000, scoped, tag = 'input window, operand 0, single buffered']
    #allocation3 [shape = 's32[1]{0}', space=sflag, size = 0x4, scoped, tag = 'scoped memory for tpu_custom_call.1']
    #allocation4 [shape = 's32[1]{0}', space=sflag, size = 0x4, scoped, tag = 'scoped memory for tpu_custom_call.1']
    #allocation5 [shape = 'u8[200704]{0}', space=vmem, size = 0x31000, scoped, tag = 'input window, operand 1, single buffered']
    #allocation6 [shape = 's32[1]{0}', space=sflag, size = 0x4, scoped, tag = 'scoped memory for tpu_custom_call.1']
    #allocation7 [shape = 'u8[200704]{0}', space=vmem, size = 0x31000, scoped, tag = 'output window, operand 0, single buffered']
    %7 = vsyncpa [#allocation3], 0
    %8 = vsyncpa [#allocation6], 0
    %9 = vsyncpa [#allocation4], 0
    // Predicated region
    $region2: #{tpu_custom_call.1} parent=1 // pred_check
      _
    $region3: #{tpu_custom_call.1} parent=1 // pred_check_branch
      %11 = sbr.rel (0) target = $region5
    $region4: #{tpu_custom_call.1} parent=1 // pred_region
      %s13 = ssub.s32 6272, 6272
      %14 = vsyncadd [#allocation3], %s13
      %s15 = sshll.u32 [#allocation2], 4
      %s16 = int_to_ptr.vmem [resolvable:$true] %s15
      %21 = dma.hbm_to_vmem [thread:$0]  %s0, 6272, %s16, [#allocation3], 896, 896, 56
    $region5: #{tpu_custom_call.1} parent=1 // pred_fallthru
      _
    // Predicated region
    $region6: #{tpu_custom_call.1} parent=1 // pred_check
      _
    $region7: #{tpu_custom_call.1} parent=1 // pred_check_branch
      %23 = sbr.rel (0) target = $region9
    $region8: #{tpu_custom_call.1} parent=1 // pred_region
      %s25 = ssub.s32 6272, 6272
      %26 = vsyncadd [#allocation6], %s25
      %s27 = sshll.u32 [#allocation5], 4
      %s28 = int_to_ptr.vmem [resolvable:$true] %s27
      %33 = dma.hbm_to_vmem [thread:$0]  %s1, 6272, %s28, [#allocation6], 896, 896, 56
    $region9: #{tpu_custom_call.1} parent=1 // pred_fallthru
      _
    // Predicated region
    $region10: #{tpu_custom_call.1} parent=1 // pred_check
      _
    $region11: #{tpu_custom_call.1} parent=1 // pred_check_branch
      %35 = sbr.rel (0) target = $region13
    $region12: #{tpu_custom_call.1} parent=1 // pred_region
      %36 = dma.done [#allocation3], 6272
    $region13: #{tpu_custom_call.1} parent=1 // pred_fallthru
      _
    // Predicated region
    $region14: #{tpu_custom_call.1} parent=1 // pred_check
      _
    $region15: #{tpu_custom_call.1} parent=1 // pred_check_branch
      %38 = sbr.rel (0) target = $region17
    $region16: #{tpu_custom_call.1} parent=1 // pred_region
      %39 = dma.done [#allocation6], 6272
    $region17: #{tpu_custom_call.1} parent=1 // pred_fallthru
      _
    %v40 = vld [vmem:[#allocation2] sm:$0xff]
    %v41 = vld [vmem:[#allocation2 + $0x8] sm:$0xff]
    %v42 = vld [vmem:[#allocation2 + $0x10] sm:$0xff]
    %v43 = vld [vmem:[#allocation2 + $0x18] sm:$0xff]
    %v44 = vld [vmem:[#allocation2 + $0x20] sm:$0xff]
    %v45 = vld [vmem:[#allocation2 + $0x28] sm:$0xff]
    %v46 = vld [vmem:[#allocation2 + $0x30] sm:$0xff]
    %v47 = vld [vmem:[#allocation2 + $0x38] sm:$0xff]
    %v48 = vld [vmem:[#allocation2 + $0x40] sm:$0xff]
    %v49 = vld [vmem:[#allocation2 + $0x48] sm:$0xff]
    %v50 = vld [vmem:[#allocation2 + $0x50] sm:$0xff]
    %v51 = vld [vmem:[#allocation2 + $0x58] sm:$0xff]
    %v52 = vld [vmem:[#allocation2 + $0x60] sm:$0xff]
    %v53 = vld [vmem:[#allocation2 + $0x68] sm:$0xff]
    %v54 = vld [vmem:[#allocation2 + $0x70] sm:$0xff]
    %v55 = vld [vmem:[#allocation2 + $0x78] sm:$0xff]
    %v56 = vld [vmem:[#allocation2 + $0x80] sm:$0xff]
    %v57 = vld [vmem:[#allocation2 + $0x88] sm:$0xff]
    %v58 = vld [vmem:[#allocation2 + $0x90] sm:$0xff]
    %v59 = vld [vmem:[#allocation2 + $0x98] sm:$0xff]
    %v60 = vld [vmem:[#allocation2 + $0xa0] sm:$0xff]
    %v61 = vld [vmem:[#allocation2 + $0xa8] sm:$0xff]
    %v62 = vld [vmem:[#allocation2 + $0xb0] sm:$0xff]
    %v63 = vld [vmem:[#allocation2 + $0xb8] sm:$0xff]
    %v64 = vld [vmem:[#allocation2 + $0xc0] sm:$0xff]
    %v65 = vld [vmem:[#allocation2 + $0xc8] sm:$0xff]
    %v66 = vld [vmem:[#allocation2 + $0xd0] sm:$0xff]
    %v67 = vld [vmem:[#allocation2 + $0xd8] sm:$0xff]
    %v68 = vld [vmem:[#allocation2 + $0xe0] sm:$0xff]
    %v69 = vld [vmem:[#allocation2 + $0xe8] sm:$0xff]
    %v70 = vld [vmem:[#allocation2 + $0xf0] sm:$0xff]
    %v71 = vld [vmem:[#allocation2 + $0xf8] sm:$0xff]
    %v72 = vld [vmem:[#allocation2 + $0x100] sm:$0xff]
    %v73 = vld [vmem:[#allocation2 + $0x108] sm:$0xff]
    %v74 = vld [vmem:[#allocation2 + $0x110] sm:$0xff]
    %v75 = vld [vmem:[#allocation2 + $0x118] sm:$0xff]
    %v76 = vld [vmem:[#allocation2 + $0x120] sm:$0xff]
    %v77 = vld [vmem:[#allocation2 + $0x128] sm:$0xff]
    %v78 = vld [vmem:[#allocation2 + $0x130] sm:$0xff]
    %v79 = vld [vmem:[#allocation2 + $0x138] sm:$0xff]
    %v80 = vld [vmem:[#allocation2 + $0x140] sm:$0xff]
    %v81 = vld [vmem:[#allocation2 + $0x148] sm:$0xff]
    %v82 = vld [vmem:[#allocation2 + $0x150] sm:$0x1]
    %v83 = vld [vmem:[#allocation2 + $0x158] sm:$0x1]
    %v84 = vld [vmem:[#allocation2 + $0x160] sm:$0x1]
    %v85 = vld [vmem:[#allocation2 + $0x168] sm:$0x1]
    %v86 = vld [vmem:[#allocation2 + $0x170] sm:$0x1]
    %v87 = vld [vmem:[#allocation2 + $0x178] sm:$0x1]
    %v88 = vld [vmem:[#allocation2 + $0x180] sm:$0x1]
    %v89 = vld [vmem:[#allocation5] sm:$0xff]
    %v90 = vld [vmem:[#allocation5 + $0x8] sm:$0xff]
    %v91 = vld [vmem:[#allocation5 + $0x10] sm:$0xff]
    %v92 = vld [vmem:[#allocation5 + $0x18] sm:$0xff]
    %v93 = vld [vmem:[#allocation5 + $0x20] sm:$0xff]
    %v94 = vld [vmem:[#allocation5 + $0x28] sm:$0xff]
    %v95 = vld [vmem:[#allocation5 + $0x30] sm:$0xff]
    %v96 = vld [vmem:[#allocation5 + $0x38] sm:$0xff]
    %v97 = vld [vmem:[#allocation5 + $0x40] sm:$0xff]
    %v98 = vld [vmem:[#allocation5 + $0x48] sm:$0xff]
    %v99 = vld [vmem:[#allocation5 + $0x50] sm:$0xff]
    %v100 = vld [vmem:[#allocation5 + $0x58] sm:$0xff]
    %v101 = vld [vmem:[#allocation5 + $0x60] sm:$0xff]
    %v102 = vld [vmem:[#allocation5 + $0x68] sm:$0xff]
    %v103 = vld [vmem:[#allocation5 + $0x70] sm:$0xff]
    %v104 = vld [vmem:[#allocation5 + $0x78] sm:$0xff]
    %v105 = vld [vmem:[#allocation5 + $0x80] sm:$0xff]
    %v106 = vld [vmem:[#allocation5 + $0x88] sm:$0xff]
    %v107 = vld [vmem:[#allocation5 + $0x90] sm:$0xff]
    %v108 = vld [vmem:[#allocation5 + $0x98] sm:$0xff]
    %v109 = vld [vmem:[#allocation5 + $0xa0] sm:$0xff]
    %v110 = vld [vmem:[#allocation5 + $0xa8] sm:$0xff]
    %v111 = vld [vmem:[#allocation5 + $0xb0] sm:$0xff]
    %v112 = vld [vmem:[#allocation5 + $0xb8] sm:$0xff]
    %v113 = vld [vmem:[#allocation5 + $0xc0] sm:$0xff]
    %v114 = vld [vmem:[#allocation5 + $0xc8] sm:$0xff]
    %v115 = vld [vmem:[#allocation5 + $0xd0] sm:$0xff]
    %v116 = vld [vmem:[#allocation5 + $0xd8] sm:$0xff]
    %v117 = vld [vmem:[#allocation5 + $0xe0] sm:$0xff]
    %v118 = vld [vmem:[#allocation5 + $0xe8] sm:$0xff]
    %v119 = vld [vmem:[#allocation5 + $0xf0] sm:$0xff]
    %v120 = vld [vmem:[#allocation5 + $0xf8] sm:$0xff]
    %v121 = vld [vmem:[#allocation5 + $0x100] sm:$0xff]
    %v122 = vld [vmem:[#allocation5 + $0x108] sm:$0xff]
    %v123 = vld [vmem:[#allocation5 + $0x110] sm:$0xff]
    %v124 = vld [vmem:[#allocation5 + $0x118] sm:$0xff]
    %v125 = vld [vmem:[#allocation5 + $0x120] sm:$0xff]
    %v126 = vld [vmem:[#allocation5 + $0x128] sm:$0xff]
    %v127 = vld [vmem:[#allocation5 + $0x130] sm:$0xff]
    %v128 = vld [vmem:[#allocation5 + $0x138] sm:$0xff]
    %v129 = vld [vmem:[#allocation5 + $0x140] sm:$0xff]
    %v130 = vld [vmem:[#allocation5 + $0x148] sm:$0xff]
    %v131 = vld [vmem:[#allocation5 + $0x150] sm:$0x1]
    %v132 = vld [vmem:[#allocation5 + $0x158] sm:$0x1]
    %v133 = vld [vmem:[#allocation5 + $0x160] sm:$0x1]
    %v134 = vld [vmem:[#allocation5 + $0x168] sm:$0x1]
    %v135 = vld [vmem:[#allocation5 + $0x170] sm:$0x1]
    %v136 = vld [vmem:[#allocation5 + $0x178] sm:$0x1]
    %v137 = vld [vmem:[#allocation5 + $0x180] sm:$0x1]
    %v138 = vadd.f32 %v40, %v89
    %v139 = vadd.f32 %v41, %v90
    %v140 = vadd.f32 %v42, %v91
    %v141 = vadd.f32 %v43, %v92
    %v142 = vadd.f32 %v44, %v93
    %v143 = vadd.f32 %v45, %v94
    %v144 = vadd.f32 %v46, %v95
    %v145 = vadd.f32 %v47, %v96
    %v146 = vadd.f32 %v48, %v97
    %v147 = vadd.f32 %v49, %v98
    %v148 = vadd.f32 %v50, %v99
    %v149 = vadd.f32 %v51, %v100
    %v150 = vadd.f32 %v52, %v101
    %v151 = vadd.f32 %v53, %v102
    %v152 = vadd.f32 %v54, %v103
    %v153 = vadd.f32 %v55, %v104
    %v154 = vadd.f32 %v56, %v105
    %v155 = vadd.f32 %v57, %v106
    %v156 = vadd.f32 %v58, %v107
    %v157 = vadd.f32 %v59, %v108
    %v158 = vadd.f32 %v60, %v109
    %v159 = vadd.f32 %v61, %v110
    %v160 = vadd.f32 %v62, %v111
    %v161 = vadd.f32 %v63, %v112
    %v162 = vadd.f32 %v64, %v113
    %v163 = vadd.f32 %v65, %v114
    %v164 = vadd.f32 %v66, %v115
    %v165 = vadd.f32 %v67, %v116
    %v166 = vadd.f32 %v68, %v117
    %v167 = vadd.f32 %v69, %v118
    %v168 = vadd.f32 %v70, %v119
    %v169 = vadd.f32 %v71, %v120
    %v170 = vadd.f32 %v72, %v121
    %v171 = vadd.f32 %v73, %v122
    %v172 = vadd.f32 %v74, %v123
    %v173 = vadd.f32 %v75, %v124
    %v174 = vadd.f32 %v76, %v125
    %v175 = vadd.f32 %v77, %v126
    %v176 = vadd.f32 %v78, %v127
    %v177 = vadd.f32 %v79, %v128
    %v178 = vadd.f32 %v80, %v129
    %v179 = vadd.f32 %v81, %v130
    %v180 = vadd.f32 %v82, %v131
    %v181 = vadd.f32 %v83, %v132
    %v182 = vadd.f32 %v84, %v133
    %v183 = vadd.f32 %v85, %v134
    %v184 = vadd.f32 %v86, %v135
    %v185 = vadd.f32 %v87, %v136
    %v186 = vadd.f32 %v88, %v137
    %187 = vst [vmem:[#allocation7] sm:$0xff] %v138
    %188 = vst [vmem:[#allocation7 + $0x8] sm:$0xff] %v139
    %189 = vst [vmem:[#allocation7 + $0x10] sm:$0xff] %v140
    %190 = vst [vmem:[#allocation7 + $0x18] sm:$0xff] %v141
    %191 = vst [vmem:[#allocation7 + $0x20] sm:$0xff] %v142
    %192 = vst [vmem:[#allocation7 + $0x28] sm:$0xff] %v143
    %193 = vst [vmem:[#allocation7 + $0x30] sm:$0xff] %v144
    %194 = vst [vmem:[#allocation7 + $0x38] sm:$0xff] %v145
    %195 = vst [vmem:[#allocation7 + $0x40] sm:$0xff] %v146
    %196 = vst [vmem:[#allocation7 + $0x48] sm:$0xff] %v147
    %197 = vst [vmem:[#allocation7 + $0x50] sm:$0xff] %v148
    %198 = vst [vmem:[#allocation7 + $0x58] sm:$0xff] %v149
    %199 = vst [vmem:[#allocation7 + $0x60] sm:$0xff] %v150
    %200 = vst [vmem:[#allocation7 + $0x68] sm:$0xff] %v151
    %201 = vst [vmem:[#allocation7 + $0x70] sm:$0xff] %v152
    %202 = vst [vmem:[#allocation7 + $0x78] sm:$0xff] %v153
    %203 = vst [vmem:[#allocation7 + $0x80] sm:$0xff] %v154
    %204 = vst [vmem:[#allocation7 + $0x88] sm:$0xff] %v155
    %205 = vst [vmem:[#allocation7 + $0x90] sm:$0xff] %v156
    %206 = vst [vmem:[#allocation7 + $0x98] sm:$0xff] %v157
    %207 = vst [vmem:[#allocation7 + $0xa0] sm:$0xff] %v158
    %208 = vst [vmem:[#allocation7 + $0xa8] sm:$0xff] %v159
    %209 = vst [vmem:[#allocation7 + $0xb0] sm:$0xff] %v160
    %210 = vst [vmem:[#allocation7 + $0xb8] sm:$0xff] %v161
    %211 = vst [vmem:[#allocation7 + $0xc0] sm:$0xff] %v162
    %212 = vst [vmem:[#allocation7 + $0xc8] sm:$0xff] %v163
    %213 = vst [vmem:[#allocation7 + $0xd0] sm:$0xff] %v164
    %214 = vst [vmem:[#allocation7 + $0xd8] sm:$0xff] %v165
    %215 = vst [vmem:[#allocation7 + $0xe0] sm:$0xff] %v166
    %216 = vst [vmem:[#allocation7 + $0xe8] sm:$0xff] %v167
    %217 = vst [vmem:[#allocation7 + $0xf0] sm:$0xff] %v168
    %218 = vst [vmem:[#allocation7 + $0xf8] sm:$0xff] %v169
    %219 = vst [vmem:[#allocation7 + $0x100] sm:$0xff] %v170
    %220 = vst [vmem:[#allocation7 + $0x108] sm:$0xff] %v171
    %221 = vst [vmem:[#allocation7 + $0x110] sm:$0xff] %v172
    %222 = vst [vmem:[#allocation7 + $0x118] sm:$0xff] %v173
    %223 = vst [vmem:[#allocation7 + $0x120] sm:$0xff] %v174
    %224 = vst [vmem:[#allocation7 + $0x128] sm:$0xff] %v175
    %225 = vst [vmem:[#allocation7 + $0x130] sm:$0xff] %v176
    %226 = vst [vmem:[#allocation7 + $0x138] sm:$0xff] %v177
    %227 = vst [vmem:[#allocation7 + $0x140] sm:$0xff] %v178
    %228 = vst [vmem:[#allocation7 + $0x148] sm:$0xff] %v179
    %229 = vst [vmem:[#allocation7 + $0x150] sm:$0x1] %v180
    %230 = vst [vmem:[#allocation7 + $0x158] sm:$0x1] %v181
    %231 = vst [vmem:[#allocation7 + $0x160] sm:$0x1] %v182
    %232 = vst [vmem:[#allocation7 + $0x168] sm:$0x1] %v183
    %233 = vst [vmem:[#allocation7 + $0x170] sm:$0x1] %v184
    %234 = vst [vmem:[#allocation7 + $0x178] sm:$0x1] %v185
    %235 = vst [vmem:[#allocation7 + $0x180] sm:$0x1] %v186
    // Predicated region
    $region18: #{tpu_custom_call.1} parent=1 // pred_check
      _
    $region19: #{tpu_custom_call.1} parent=1 // pred_check_branch
      %237 = sbr.rel (0) target = $region21
    $region20: #{tpu_custom_call.1} parent=1 // pred_region
      %s239 = ssub.s32 6272, 6272
      %240 = vsyncadd [#allocation4], %s239
      %s241 = sshll.u32 [#allocation7], 4
      %s242 = int_to_ptr.vmem [resolvable:$true] %s241
      %247 = dma.vmem_to_hbm [thread:$0]  %s242, 6272, %s2, [#allocation4], 896, 896, 56
    $region21: #{tpu_custom_call.1} parent=1 // pred_fallthru
      _
    // Predicated region
    $region22: #{tpu_custom_call.1} parent=1 // pred_check
      _
    $region23: #{tpu_custom_call.1} parent=1 // pred_check_branch
      %249 = sbr.rel (0) target = $region25
    $region24: #{tpu_custom_call.1} parent=1 // pred_region
      %250 = dma.done [#allocation4], 6272
    $region25: #{tpu_custom_call.1} parent=1 // pred_fallthru
      _
    %251 = vsyncpa [#allocation3], 1
    %252 = vsyncpa [#allocation6], 1
    %253 = vsyncpa [#allocation4], 1

</llo_original>
